<compile_context>
chip_gen: v6e
topology: v6e:2x2x1
jax: 0.10.0
libtpu: 0.0.40
codegen_flags: <defaults>
</compile_context>

<pallas_src>
import functools

import jax
import jax.numpy as jnp
from jax.experimental import pallas as pl
from jax.experimental.pallas import tpu as pltpu


def _block_kernel(x_ref, w_ref, b_ref, fcw_ref, fcb_ref, m_ref, o_ref, *, W):
    """One batch element per grid step (NCHW-native, spatial flattened).

    x_ref   : (1, C_in, H*W)    f32 input tile
    w_ref   : (9, C_out, C_in)  bf16 conv weight, tap-major (t = 3*dh + dw)
    b_ref   : (C_out, 1)        f32 conv bias (column vector)
    fcw_ref : (C_out, C_in)     f32 AD_Block linear weight
    fcb_ref : (C_out, 1)        f32 AD_Block linear bias
    m_ref   : (9, 1, H*W)       f32 per-tap border validity masks (0/1)
    o_ref   : (1, C_out, H*W)   f32 output tile
    """
    S = x_ref.shape[2]
    C_out = o_ref.shape[1]

    x = x_ref[0]                                               # (C_in, S) f32

    # ---- AD_Block mask: GAP -> linear -> sigmoid (all f32) -----------------
    gap = jnp.sum(x, axis=1, keepdims=True) * (1.0 / S)        # (C_in, 1)
    logits = jnp.dot(fcw_ref[...], gap,
                     preferred_element_type=jnp.float32) + fcb_ref[...]
    mask = jax.nn.sigmoid(logits)                              # (C_out, 1)

    # ---- single bf16 cast pass feeding the MXU -----------------------------
    xb = x.astype(jnp.bfloat16)                                # (C_in, S) bf16

    # ---- 3x3 conv (padding=1) as 9 accumulated channel-contraction dots ----
    # Zero padding is implicit: each tap is a static lane shift of the
    # flattened image; positions that read across a row/image boundary (incl.
    # the roll wrap-around) are exactly the ones zeroed by the tap mask.
    acc = jnp.zeros((C_out, S), jnp.float32)
    for t in range(9):
        di, dj = t // 3 - 1, t % 3 - 1                         # offsets in {-1,0,1}
        off = di * W + dj
        src = xb if off == 0 else jnp.roll(xb, -off, axis=1)   # src[:, s] = x[:, s+off]
        tap = jnp.dot(w_ref[t], src,
                      preferred_element_type=jnp.float32)      # (C_out, S)
        if not (di == 0 and dj == 0):
            tap = tap * m_ref[t]                               # (1, S) border mask
        acc = acc + tap

    # ---- bias + relu + channel-mask multiply (f32 epilogue) ----------------
    out = jnp.maximum(acc + b_ref[...], 0.0) * mask            # (C_out, S)
    o_ref[0] = out.astype(o_ref.dtype)


def basic_block_vgg16_ad(x_nchw, conv_w, conv_b, fc_w, fc_b):
    """x_nchw: (N, C_in, H, W) float32.  Returns (N, C_out, H, W) float32."""
    N, C_in, H, W = x_nchw.shape
    C_out = conv_w.shape[0]
    S = H * W

    # Metadata-only reshape: no HBM transpose pass before the kernel.
    x_flat = x_nchw.reshape(N, C_in, S).astype(jnp.float32)

    # OIHW conv weight -> (9, C_out, C_in) tap-major, bf16 for the MXU.
    w9 = jnp.transpose(conv_w, (2, 3, 0, 1)).reshape(9, C_out, C_in)
    w9 = w9.astype(jnp.bfloat16)
    b_col = conv_b.reshape(C_out, 1).astype(jnp.float32)
    fcw = fc_w.astype(jnp.float32)                             # (C_out, C_in)
    fcb = fc_b.reshape(C_out, 1).astype(jnp.float32)

    # Per-tap border-validity masks (0/1), computed once host/XLA-side so the
    # kernel needs no iota / integer-division work.
    ii = jnp.arange(H, dtype=jnp.int32).reshape(H, 1)
    jj = jnp.arange(W, dtype=jnp.int32).reshape(1, W)
    tap_masks = []
    for t in range(9):
        di, dj = t // 3 - 1, t % 3 - 1
        ok_i = (ii + di >= 0) & (ii + di <= H - 1)
        ok_j = (jj + dj >= 0) & (jj + dj <= W - 1)
        tap_masks.append((ok_i & ok_j).astype(jnp.float32).reshape(1, S))
    tap_mask = jnp.stack(tap_masks, axis=0)                    # (9, 1, S)

    # Exact VMEM budget: double-buffered I/O tiles, constant-index weights and
    # masks counted once, in-kernel live values, plus fixed headroom; clamped
    # to physical VMEM minus headroom for compiler-internal scratch.
    bytes_io = 2 * (C_in * S * 4 + C_out * S * 4)              # double-buffered tiles
    bytes_const = (9 * C_out * C_in * 2 + C_out * C_in * 4
                   + 2 * C_out * 4 + 9 * S * 4)                # weights + masks (x1)
    bytes_live = C_in * S * 2 * 2 + 3 * C_out * S * 4          # bf16 x + shift, acc/tap/out
    budget = bytes_io + bytes_const + bytes_live + (2 << 20)
    try:
        vmem_cap = int(pltpu.get_tpu_info().vmem_capacity_bytes)
    except Exception:  # conservative fallback if the query is unavailable
        vmem_cap = 64 * 1024 * 1024
    vmem_limit = int(min(max(budget, 4 << 20), vmem_cap - (8 << 20)))

    out_flat = pl.pallas_call(
        functools.partial(_block_kernel, W=W),
        out_shape=jax.ShapeDtypeStruct((N, C_out, S), jnp.float32),
        grid_spec=pltpu.PrefetchScalarGridSpec(
            num_scalar_prefetch=0,
            grid=(N,),
            in_specs=[
                pl.BlockSpec((1, C_in, S), lambda b: (b, 0, 0)),
                pl.BlockSpec((9, C_out, C_in), lambda b: (0, 0, 0)),
                pl.BlockSpec((C_out, 1), lambda b: (0, 0)),
                pl.BlockSpec((C_out, C_in), lambda b: (0, 0)),
                pl.BlockSpec((C_out, 1), lambda b: (0, 0)),
                pl.BlockSpec((9, 1, S), lambda b: (0, 0, 0)),
            ],
            out_specs=pl.BlockSpec((1, C_out, S), lambda b: (b, 0, 0)),
        ),
        compiler_params=pltpu.CompilerParams(
            dimension_semantics=("parallel",),
            vmem_limit_bytes=vmem_limit,
        ),
    )(x_flat, w9, b_col, fcw, fcb, tap_mask)

    # Metadata-only reshape back to NCHW for PyTorch parity.
    return out_flat.reshape(N, C_out, H, W)


def _reference(x_nchw, conv_w, conv_b, fc_w, fc_b):
    """Pure-JAX f32 reference for a correctness check."""
    gap = jnp.mean(x_nchw, axis=(2, 3))                            # (N, C_in)
    mask = jax.nn.sigmoid(gap @ fc_w.T + fc_b)                     # (N, C_out)
    conv = jax.lax.conv_general_dilated(
        x_nchw, conv_w, window_strides=(1, 1), padding=((1, 1), (1, 1)),
        dimension_numbers=("NCHW", "OIHW", "NCHW"))
    conv = conv + conv_b[None, :, None, None]
    return mask[:, :, None, None] * jnp.maximum(conv, 0.0)


if __name__ == "__main__":
    # Small deterministic setup: batch=2, in_planes=4, planes=8, spatial=16.
    N, C_in, C_out, H, W = 2, 4, 8, 16, 16
    key = jax.random.PRNGKey(0)
    kx, kw, kb, kfw, kfb = jax.random.split(key, 5)

    x = jax.random.normal(kx, (N, C_in, H, W), jnp.float32)
    conv_w = jax.random.normal(kw, (C_out, C_in, 3, 3), jnp.float32) * 0.1
    conv_b = jax.random.normal(kb, (C_out,), jnp.float32) * 0.1
    fc_w = jax.random.normal(kfw, (C_out, C_in), jnp.float32) * 0.1
    fc_b = jax.random.normal(kfb, (C_out,), jnp.float32) * 0.1

    out = basic_block_vgg16_ad(x, conv_w, conv_b, fc_w, fc_b)
    out = jax.block_until_ready(out)

    ref = _reference(x, conv_w, conv_b, fc_w, fc_b)
    assert out.shape == (N, C_out, H, W)
    # bf16 MXU inputs (f32 accumulation) -> loosened tolerance vs. f32 ref.
    assert jnp.allclose(out, ref, atol=2e-2, rtol=2e-2), float(
        jnp.max(jnp.abs(out - ref)))
    print("KERNEL_OK")
</pallas_src>

<mosaic_0001>
module attributes {stable_mosaic.version = 11 : i64} {
  func.func @_block_kernel(%arg0: i32, %arg1: memref<1x4x256xf32, #tpu.memory_space<vmem>>, %arg2: memref<9x8x4xbf16, #tpu.memory_space<vmem>>, %arg3: memref<8x1xf32, #tpu.memory_space<vmem>>, %arg4: memref<8x4xf32, #tpu.memory_space<vmem>>, %arg5: memref<8x1xf32, #tpu.memory_space<vmem>>, %arg6: memref<9x1x256xf32, #tpu.memory_space<vmem>>, %arg7: memref<1x8x256xf32, #tpu.memory_space<vmem>>) attributes {dimension_semantics = [#tpu.dimension_semantics<parallel>], iteration_bounds = array<i64: 2>, scalar_prefetch = 0 : i64, scratch_operands = 0 : i64, tpu.core_type = #tpu.core_type<tc>, window_params = [{transform_indices = @transform_0, window_bounds = array<i64: 1, 4, 256>}, {pipeline_mode = #tpu.pipeline_mode<synchronous>, transform_indices = @transform_1, window_bounds = array<i64: 9, 8, 4>}, {pipeline_mode = #tpu.pipeline_mode<synchronous>, transform_indices = @transform_2, window_bounds = array<i64: 8, 1>}, {pipeline_mode = #tpu.pipeline_mode<synchronous>, transform_indices = @transform_3, window_bounds = array<i64: 8, 4>}, {pipeline_mode = #tpu.pipeline_mode<synchronous>, transform_indices = @transform_4, window_bounds = array<i64: 8, 1>}, {pipeline_mode = #tpu.pipeline_mode<synchronous>, transform_indices = @transform_5, window_bounds = array<i64: 9, 1, 256>}, {transform_indices = @transform_6, window_bounds = array<i64: 1, 8, 256>}]} {
    %c0 = arith.constant 0 : index
    %c0_0 = arith.constant 0 : index
    %c0_1 = arith.constant 0 : index
    %0 = vector.load %arg1[%c0, %c0_0, %c0_1] : memref<1x4x256xf32, #tpu.memory_space<vmem>>, vector<1x4x256xf32>
    %1 = vector.shape_cast %0 : vector<1x4x256xf32> to vector<4x256xf32>
    %cst = arith.constant dense<0.000000e+00> : vector<4xf32>
    %2 = vector.multi_reduction <add>, %1, %cst [1] : vector<4x256xf32> to vector<4xf32>
    %3 = vector.shape_cast %2 : vector<4xf32> to vector<4x1xf32>
    %cst_2 = arith.constant 3.906250e-03 : f32
    %4 = vector.broadcast %cst_2 : f32 to vector<4x1xf32>
    %5 = arith.mulf %3, %4 : vector<4x1xf32>
    %c0_3 = arith.constant 0 : index
    %c0_4 = arith.constant 0 : index
    %6 = vector.load %arg4[%c0_3, %c0_4] : memref<8x4xf32, #tpu.memory_space<vmem>>, vector<8x4xf32>
    %cst_5 = arith.constant dense<0.000000e+00> : vector<8x1xf32>
    %7 = tpu.matmul %6, %5, %cst_5 {dimension_numbers = #tpu.dot_dimension_numbers<[1], [0], [0], [1], [0, 0, 1, 1], [], []>} : vector<8x4xf32>, vector<4x1xf32>, vector<8x1xf32> -> vector<8x1xf32>
    %c0_6 = arith.constant 0 : index
    %c0_7 = arith.constant 0 : index
    %8 = vector.load %arg5[%c0_6, %c0_7] : memref<8x1xf32, #tpu.memory_space<vmem>>, vector<8x1xf32>
    %9 = arith.addf %7, %8 : vector<8x1xf32>
    %10 = arith.negf %9 : vector<8x1xf32>
    %11 = math.exp %10 : vector<8x1xf32>
    %cst_8 = arith.constant 1.000000e+00 : f32
    %12 = vector.broadcast %cst_8 : f32 to vector<8x1xf32>
    %13 = arith.addf %12, %11 : vector<8x1xf32>
    %14 = arith.divf %12, %13 : vector<8x1xf32>
    %15 = arith.truncf %1 : vector<4x256xf32> to vector<4x256xbf16>
    %cst_9 = arith.constant 0.000000e+00 : f32
    %16 = vector.broadcast %cst_9 : f32 to vector<8x256xf32>
    %17 = vector.extract_strided_slice %15 {offsets = [0, 239], sizes = [4, 17], strides = [1, 1]} : vector<4x256xbf16> to vector<4x17xbf16>
    %18 = vector.extract_strided_slice %15 {offsets = [0, 0], sizes = [4, 239], strides = [1, 1]} : vector<4x256xbf16> to vector<4x239xbf16>
    %19 = tpu.concatenate %17, %18 in 1 : vector<4x17xbf16>, vector<4x239xbf16> -> vector<4x256xbf16>
    %c0_10 = arith.constant 0 : index
    %c0_11 = arith.constant 0 : index
    %c0_12 = arith.constant 0 : index
    %20 = vector.load %arg2[%c0_10, %c0_11, %c0_12] : memref<9x8x4xbf16, #tpu.memory_space<vmem>>, vector<1x8x4xbf16>
    %21 = vector.shape_cast %20 : vector<1x8x4xbf16> to vector<8x4xbf16>
    %cst_13 = arith.constant dense<0.000000e+00> : vector<8x256xf32>
    %22 = tpu.matmul %21, %19, %cst_13 {dimension_numbers = #tpu.dot_dimension_numbers<[1], [0], [0], [1], [0, 0, 1, 1], [], []>} : vector<8x4xbf16>, vector<4x256xbf16>, vector<8x256xf32> -> vector<8x256xf32>
    %c0_14 = arith.constant 0 : index
    %c0_15 = arith.constant 0 : index
    %c0_16 = arith.constant 0 : index
    %23 = vector.load %arg6[%c0_14, %c0_15, %c0_16] : memref<9x1x256xf32, #tpu.memory_space<vmem>>, vector<1x1x256xf32>
    %24 = vector.shape_cast %23 : vector<1x1x256xf32> to vector<1x256xf32>
    %25 = vector.broadcast %24 : vector<1x256xf32> to vector<8x256xf32>
    %26 = arith.mulf %22, %25 : vector<8x256xf32>
    %27 = arith.addf %16, %26 : vector<8x256xf32>
    %28 = vector.extract_strided_slice %15 {offsets = [0, 240], sizes = [4, 16], strides = [1, 1]} : vector<4x256xbf16> to vector<4x16xbf16>
    %29 = vector.extract_strided_slice %15 {offsets = [0, 0], sizes = [4, 240], strides = [1, 1]} : vector<4x256xbf16> to vector<4x240xbf16>
    %30 = tpu.concatenate %28, %29 in 1 : vector<4x16xbf16>, vector<4x240xbf16> -> vector<4x256xbf16>
    %c1 = arith.constant 1 : index
    %c0_17 = arith.constant 0 : index
    %c0_18 = arith.constant 0 : index
    %31 = vector.load %arg2[%c1, %c0_17, %c0_18] : memref<9x8x4xbf16, #tpu.memory_space<vmem>>, vector<1x8x4xbf16>
    %32 = vector.shape_cast %31 : vector<1x8x4xbf16> to vector<8x4xbf16>
    %cst_19 = arith.constant dense<0.000000e+00> : vector<8x256xf32>
    %33 = tpu.matmul %32, %30, %cst_19 {dimension_numbers = #tpu.dot_dimension_numbers<[1], [0], [0], [1], [0, 0, 1, 1], [], []>} : vector<8x4xbf16>, vector<4x256xbf16>, vector<8x256xf32> -> vector<8x256xf32>
    %c1_20 = arith.constant 1 : index
    %c0_21 = arith.constant 0 : index
    %c0_22 = arith.constant 0 : index
    %34 = vector.load %arg6[%c1_20, %c0_21, %c0_22] : memref<9x1x256xf32, #tpu.memory_space<vmem>>, vector<1x1x256xf32>
    %35 = vector.shape_cast %34 : vector<1x1x256xf32> to vector<1x256xf32>
    %36 = vector.broadcast %35 : vector<1x256xf32> to vector<8x256xf32>
    %37 = arith.mulf %33, %36 : vector<8x256xf32>
    %38 = arith.addf %27, %37 : vector<8x256xf32>
    %39 = vector.extract_strided_slice %15 {offsets = [0, 241], sizes = [4, 15], strides = [1, 1]} : vector<4x256xbf16> to vector<4x15xbf16>
    %40 = vector.extract_strided_slice %15 {offsets = [0, 0], sizes = [4, 241], strides = [1, 1]} : vector<4x256xbf16> to vector<4x241xbf16>
    %41 = tpu.concatenate %39, %40 in 1 : vector<4x15xbf16>, vector<4x241xbf16> -> vector<4x256xbf16>
    %c2 = arith.constant 2 : index
    %c0_23 = arith.constant 0 : index
    %c0_24 = arith.constant 0 : index
    %42 = vector.load %arg2[%c2, %c0_23, %c0_24] : memref<9x8x4xbf16, #tpu.memory_space<vmem>>, vector<1x8x4xbf16>
    %43 = vector.shape_cast %42 : vector<1x8x4xbf16> to vector<8x4xbf16>
    %cst_25 = arith.constant dense<0.000000e+00> : vector<8x256xf32>
    %44 = tpu.matmul %43, %41, %cst_25 {dimension_numbers = #tpu.dot_dimension_numbers<[1], [0], [0], [1], [0, 0, 1, 1], [], []>} : vector<8x4xbf16>, vector<4x256xbf16>, vector<8x256xf32> -> vector<8x256xf32>
    %c2_26 = arith.constant 2 : index
    %c0_27 = arith.constant 0 : index
    %c0_28 = arith.constant 0 : index
    %45 = vector.load %arg6[%c2_26, %c0_27, %c0_28] : memref<9x1x256xf32, #tpu.memory_space<vmem>>, vector<1x1x256xf32>
    %46 = vector.shape_cast %45 : vector<1x1x256xf32> to vector<1x256xf32>
    %47 = vector.broadcast %46 : vector<1x256xf32> to vector<8x256xf32>
    %48 = arith.mulf %44, %47 : vector<8x256xf32>
    %49 = arith.addf %38, %48 : vector<8x256xf32>
    %50 = vector.extract_strided_slice %15 {offsets = [0, 255], sizes = [4, 1], strides = [1, 1]} : vector<4x256xbf16> to vector<4x1xbf16>
    %51 = vector.extract_strided_slice %15 {offsets = [0, 0], sizes = [4, 255], strides = [1, 1]} : vector<4x256xbf16> to vector<4x255xbf16>
    %52 = tpu.concatenate %50, %51 in 1 : vector<4x1xbf16>, vector<4x255xbf16> -> vector<4x256xbf16>
    %c3 = arith.constant 3 : index
    %c0_29 = arith.constant 0 : index
    %c0_30 = arith.constant 0 : index
    %53 = vector.load %arg2[%c3, %c0_29, %c0_30] : memref<9x8x4xbf16, #tpu.memory_space<vmem>>, vector<1x8x4xbf16>
    %54 = vector.shape_cast %53 : vector<1x8x4xbf16> to vector<8x4xbf16>
    %cst_31 = arith.constant dense<0.000000e+00> : vector<8x256xf32>
    %55 = tpu.matmul %54, %52, %cst_31 {dimension_numbers = #tpu.dot_dimension_numbers<[1], [0], [0], [1], [0, 0, 1, 1], [], []>} : vector<8x4xbf16>, vector<4x256xbf16>, vector<8x256xf32> -> vector<8x256xf32>
    %c3_32 = arith.constant 3 : index
    %c0_33 = arith.constant 0 : index
    %c0_34 = arith.constant 0 : index
    %56 = vector.load %arg6[%c3_32, %c0_33, %c0_34] : memref<9x1x256xf32, #tpu.memory_space<vmem>>, vector<1x1x256xf32>
    %57 = vector.shape_cast %56 : vector<1x1x256xf32> to vector<1x256xf32>
    %58 = vector.broadcast %57 : vector<1x256xf32> to vector<8x256xf32>
    %59 = arith.mulf %55, %58 : vector<8x256xf32>
    %60 = arith.addf %49, %59 : vector<8x256xf32>
    %c4 = arith.constant 4 : index
    %c0_35 = arith.constant 0 : index
    %c0_36 = arith.constant 0 : index
    %61 = vector.load %arg2[%c4, %c0_35, %c0_36] : memref<9x8x4xbf16, #tpu.memory_space<vmem>>, vector<1x8x4xbf16>
    %62 = vector.shape_cast %61 : vector<1x8x4xbf16> to vector<8x4xbf16>
    %cst_37 = arith.constant dense<0.000000e+00> : vector<8x256xf32>
    %63 = tpu.matmul %62, %15, %cst_37 {dimension_numbers = #tpu.dot_dimension_numbers<[1], [0], [0], [1], [0, 0, 1, 1], [], []>} : vector<8x4xbf16>, vector<4x256xbf16>, vector<8x256xf32> -> vector<8x256xf32>
    %64 = arith.addf %60, %63 : vector<8x256xf32>
    %65 = vector.extract_strided_slice %15 {offsets = [0, 1], sizes = [4, 255], strides = [1, 1]} : vector<4x256xbf16> to vector<4x255xbf16>
    %66 = vector.extract_strided_slice %15 {offsets = [0, 0], sizes = [4, 1], strides = [1, 1]} : vector<4x256xbf16> to vector<4x1xbf16>
    %67 = tpu.concatenate %65, %66 in 1 : vector<4x255xbf16>, vector<4x1xbf16> -> vector<4x256xbf16>
    %c5 = arith.constant 5 : index
    %c0_38 = arith.constant 0 : index
    %c0_39 = arith.constant 0 : index
    %68 = vector.load %arg2[%c5, %c0_38, %c0_39] : memref<9x8x4xbf16, #tpu.memory_space<vmem>>, vector<1x8x4xbf16>
    %69 = vector.shape_cast %68 : vector<1x8x4xbf16> to vector<8x4xbf16>
    %cst_40 = arith.constant dense<0.000000e+00> : vector<8x256xf32>
    %70 = tpu.matmul %69, %67, %cst_40 {dimension_numbers = #tpu.dot_dimension_numbers<[1], [0], [0], [1], [0, 0, 1, 1], [], []>} : vector<8x4xbf16>, vector<4x256xbf16>, vector<8x256xf32> -> vector<8x256xf32>
    %c5_41 = arith.constant 5 : index
    %c0_42 = arith.constant 0 : index
    %c0_43 = arith.constant 0 : index
    %71 = vector.load %arg6[%c5_41, %c0_42, %c0_43] : memref<9x1x256xf32, #tpu.memory_space<vmem>>, vector<1x1x256xf32>
    %72 = vector.shape_cast %71 : vector<1x1x256xf32> to vector<1x256xf32>
    %73 = vector.broadcast %72 : vector<1x256xf32> to vector<8x256xf32>
    %74 = arith.mulf %70, %73 : vector<8x256xf32>
    %75 = arith.addf %64, %74 : vector<8x256xf32>
    %76 = vector.extract_strided_slice %15 {offsets = [0, 15], sizes = [4, 241], strides = [1, 1]} : vector<4x256xbf16> to vector<4x241xbf16>
    %77 = vector.extract_strided_slice %15 {offsets = [0, 0], sizes = [4, 15], strides = [1, 1]} : vector<4x256xbf16> to vector<4x15xbf16>
    %78 = tpu.concatenate %76, %77 in 1 : vector<4x241xbf16>, vector<4x15xbf16> -> vector<4x256xbf16>
    %c6 = arith.constant 6 : index
    %c0_44 = arith.constant 0 : index
    %c0_45 = arith.constant 0 : index
    %79 = vector.load %arg2[%c6, %c0_44, %c0_45] : memref<9x8x4xbf16, #tpu.memory_space<vmem>>, vector<1x8x4xbf16>
    %80 = vector.shape_cast %79 : vector<1x8x4xbf16> to vector<8x4xbf16>
    %cst_46 = arith.constant dense<0.000000e+00> : vector<8x256xf32>
    %81 = tpu.matmul %80, %78, %cst_46 {dimension_numbers = #tpu.dot_dimension_numbers<[1], [0], [0], [1], [0, 0, 1, 1], [], []>} : vector<8x4xbf16>, vector<4x256xbf16>, vector<8x256xf32> -> vector<8x256xf32>
    %c6_47 = arith.constant 6 : index
    %c0_48 = arith.constant 0 : index
    %c0_49 = arith.constant 0 : index
    %82 = vector.load %arg6[%c6_47, %c0_48, %c0_49] : memref<9x1x256xf32, #tpu.memory_space<vmem>>, vector<1x1x256xf32>
    %83 = vector.shape_cast %82 : vector<1x1x256xf32> to vector<1x256xf32>
    %84 = vector.broadcast %83 : vector<1x256xf32> to vector<8x256xf32>
    %85 = arith.mulf %81, %84 : vector<8x256xf32>
    %86 = arith.addf %75, %85 : vector<8x256xf32>
    %87 = vector.extract_strided_slice %15 {offsets = [0, 16], sizes = [4, 240], strides = [1, 1]} : vector<4x256xbf16> to vector<4x240xbf16>
    %88 = vector.extract_strided_slice %15 {offsets = [0, 0], sizes = [4, 16], strides = [1, 1]} : vector<4x256xbf16> to vector<4x16xbf16>
    %89 = tpu.concatenate %87, %88 in 1 : vector<4x240xbf16>, vector<4x16xbf16> -> vector<4x256xbf16>
    %c7 = arith.constant 7 : index
    %c0_50 = arith.constant 0 : index
    %c0_51 = arith.constant 0 : index
    %90 = vector.load %arg2[%c7, %c0_50, %c0_51] : memref<9x8x4xbf16, #tpu.memory_space<vmem>>, vector<1x8x4xbf16>
    %91 = vector.shape_cast %90 : vector<1x8x4xbf16> to vector<8x4xbf16>
    %cst_52 = arith.constant dense<0.000000e+00> : vector<8x256xf32>
    %92 = tpu.matmul %91, %89, %cst_52 {dimension_numbers = #tpu.dot_dimension_numbers<[1], [0], [0], [1], [0, 0, 1, 1], [], []>} : vector<8x4xbf16>, vector<4x256xbf16>, vector<8x256xf32> -> vector<8x256xf32>
    %c7_53 = arith.constant 7 : index
    %c0_54 = arith.constant 0 : index
    %c0_55 = arith.constant 0 : index
    %93 = vector.load %arg6[%c7_53, %c0_54, %c0_55] : memref<9x1x256xf32, #tpu.memory_space<vmem>>, vector<1x1x256xf32>
    %94 = vector.shape_cast %93 : vector<1x1x256xf32> to vector<1x256xf32>
    %95 = vector.broadcast %94 : vector<1x256xf32> to vector<8x256xf32>
    %96 = arith.mulf %92, %95 : vector<8x256xf32>
    %97 = arith.addf %86, %96 : vector<8x256xf32>
    %98 = vector.extract_strided_slice %15 {offsets = [0, 17], sizes = [4, 239], strides = [1, 1]} : vector<4x256xbf16> to vector<4x239xbf16>
    %99 = vector.extract_strided_slice %15 {offsets = [0, 0], sizes = [4, 17], strides = [1, 1]} : vector<4x256xbf16> to vector<4x17xbf16>
    %100 = tpu.concatenate %98, %99 in 1 : vector<4x239xbf16>, vector<4x17xbf16> -> vector<4x256xbf16>
    %c8 = arith.constant 8 : index
    %c0_56 = arith.constant 0 : index
    %c0_57 = arith.constant 0 : index
    %101 = vector.load %arg2[%c8, %c0_56, %c0_57] : memref<9x8x4xbf16, #tpu.memory_space<vmem>>, vector<1x8x4xbf16>
    %102 = vector.shape_cast %101 : vector<1x8x4xbf16> to vector<8x4xbf16>
    %cst_58 = arith.constant dense<0.000000e+00> : vector<8x256xf32>
    %103 = tpu.matmul %102, %100, %cst_58 {dimension_numbers = #tpu.dot_dimension_numbers<[1], [0], [0], [1], [0, 0, 1, 1], [], []>} : vector<8x4xbf16>, vector<4x256xbf16>, vector<8x256xf32> -> vector<8x256xf32>
    %c8_59 = arith.constant 8 : index
    %c0_60 = arith.constant 0 : index
    %c0_61 = arith.constant 0 : index
    %104 = vector.load %arg6[%c8_59, %c0_60, %c0_61] : memref<9x1x256xf32, #tpu.memory_space<vmem>>, vector<1x1x256xf32>
    %105 = vector.shape_cast %104 : vector<1x1x256xf32> to vector<1x256xf32>
    %106 = vector.broadcast %105 : vector<1x256xf32> to vector<8x256xf32>
    %107 = arith.mulf %103, %106 : vector<8x256xf32>
    %108 = arith.addf %97, %107 : vector<8x256xf32>
    %c0_62 = arith.constant 0 : index
    %c0_63 = arith.constant 0 : index
    %109 = vector.load %arg3[%c0_62, %c0_63] : memref<8x1xf32, #tpu.memory_space<vmem>>, vector<8x1xf32>
    %110 = vector.broadcast %109 : vector<8x1xf32> to vector<8x256xf32>
    %111 = arith.addf %108, %110 : vector<8x256xf32>
    %cst_64 = arith.constant 0.000000e+00 : f32
    %112 = vector.broadcast %cst_64 : f32 to vector<8x256xf32>
    %113 = arith.maximumf %111, %112 : vector<8x256xf32>
    %114 = vector.broadcast %14 : vector<8x1xf32> to vector<8x256xf32>
    %115 = arith.mulf %113, %114 : vector<8x256xf32>
    %c0_65 = arith.constant 0 : index
    %c0_66 = arith.constant 0 : index
    %c0_67 = arith.constant 0 : index
    %116 = vector.load %arg7[%c0_65, %c0_66, %c0_67] : memref<1x8x256xf32, #tpu.memory_space<vmem>>, vector<1x8x256xf32>
    %117 = vector.shape_cast %116 : vector<1x8x256xf32> to vector<8x256xf32>
    %118 = vector.shape_cast %115 : vector<8x256xf32> to vector<1x8x256xf32>
    tpu.vector_store %arg7[%c0_65, %c0_66, %c0_67], %118 {strides = array<i32>} : memref<1x8x256xf32, #tpu.memory_space<vmem>>, vector<1x8x256xf32>,
    return
  }
  func.func @transform_0(%arg0: i32) -> (i32, i32, i32) {
    %c0_i32 = arith.constant 0 : i32
    %c0_i32_0 = arith.constant 0 : i32
    %c0_i32_1 = arith.constant 0 : i32
    return %arg0, %c0_i32, %c0_i32_0 : i32, i32, i32
  }
  func.func @transform_1(%arg0: i32) -> (i32, i32, i32) {
    %c0_i32 = arith.constant 0 : i32
    %c0_i32_0 = arith.constant 0 : i32
    %c0_i32_1 = arith.constant 0 : i32
    %c0_i32_2 = arith.constant 0 : i32
    return %c0_i32, %c0_i32_0, %c0_i32_1 : i32, i32, i32
  }
  func.func @transform_2(%arg0: i32) -> (i32, i32) {
    %c0_i32 = arith.constant 0 : i32
    %c0_i32_0 = arith.constant 0 : i32
    %c0_i32_1 = arith.constant 0 : i32
    return %c0_i32, %c0_i32_0 : i32, i32
  }
  func.func @transform_3(%arg0: i32) -> (i32, i32) {
    %c0_i32 = arith.constant 0 : i32
    %c0_i32_0 = arith.constant 0 : i32
    %c0_i32_1 = arith.constant 0 : i32
    return %c0_i32, %c0_i32_0 : i32, i32
  }
  func.func @transform_4(%arg0: i32) -> (i32, i32) {
    %c0_i32 = arith.constant 0 : i32
    %c0_i32_0 = arith.constant 0 : i32
    %c0_i32_1 = arith.constant 0 : i32
    return %c0_i32, %c0_i32_0 : i32, i32
  }
  func.func @transform_5(%arg0: i32) -> (i32, i32, i32) {
    %c0_i32 = arith.constant 0 : i32
    %c0_i32_0 = arith.constant 0 : i32
    %c0_i32_1 = arith.constant 0 : i32
    %c0_i32_2 = arith.constant 0 : i32
    return %c0_i32, %c0_i32_0, %c0_i32_1 : i32, i32, i32
  }
  func.func @transform_6(%arg0: i32) -> (i32, i32, i32) {
    %c0_i32 = arith.constant 0 : i32
    %c0_i32_0 = arith.constant 0 : i32
    %c0_i32_1 = arith.constant 0 : i32
    return %arg0, %c0_i32, %c0_i32_0 : i32, i32, i32
  }
}

</mosaic_0001>

<llo_original>
// kernel: tpu_custom_call.1
$region0: #{tpu_custom_call.1}
  #allocation0 [shape = 'u32[]', space=smem, size = 0x4, offset = 0x4, fixed_abs, tag = 'smem constant byte address 0x4 - core index']
  #allocation1 [shape = 'u32[144,128]{1,0:T(1,128)}', space=vmem, size = 0x12000, scoped, tag = 'internal scratch']
  %s0 = inlined_call_operand.vmem [shape: f32[2,4,256], index: 0, kind: input, shape index: {}]
  %s1 = inlined_call_operand.vmem [shape: bf16[9,8,4], index: 1, kind: input, shape index: {}]
  %s2 = inlined_call_operand.vmem [shape: f32[8,1], index: 2, kind: input, shape index: {}]
  %s3 = inlined_call_operand.vmem [shape: f32[8,4], index: 3, kind: input, shape index: {}]
  %s4 = inlined_call_operand.vmem [shape: f32[8,1], index: 4, kind: input, shape index: {}]
  %s5 = inlined_call_operand.vmem [shape: f32[9,1,256], index: 5, kind: input, shape index: {}]
  %s6 = inlined_call_operand.hbm [shape: f32[2,8,256], index: 6, kind: output, shape index: {}]
  %s7 = sld [smem:[#allocation0]]
  $region57: #{tpu_custom_call.1} parent=0
    _
  %s9 = ssub.s32 1, %s7
  %s10 = scalar_select 0, %s9, %s7
  $region1: #{tpu_custom_call.1} parent=0
    #allocation2 [shape = 'u8[16384]{0}', space=vmem, size = 0x4000, scoped, tag = 'output window, operand 0']
    #allocation3 [shape = 's32[2]{0}', space=sflag, size = 0x8, scoped, tag = 'scoped memory for tpu_custom_call.1']
    %11 = vsyncpa [#allocation3], 0
    %s12 = scalar_lea.sflag [#allocation3], 1
    %13 = vsyncpa %s12, 0
    loop: start=0, step=1, limit=4
    $region2: #{tpu_custom_call.1} parent=1 // loop_pre_header
      _
    $region3: #{tpu_custom_call.1} parent=1 // loop_header
      %s15 = sphi 0, %s19
      %p16 = scmp.ge.s32.totalorder %s15, 4
      %s25 = sphi 0, %s27
      %s28 = sphi 0, %s25
      %s29 = sphi 0, %s28
      %s45 = sphi 0, %s29
      %s49 = sphi 0, %s49
      %s51 = sphi 0, %s49
      %s52 = sphi 0, %s51
      %s66 = sphi 0, %s52
      %s70 = sphi 0, %s70
      %s72 = sphi 0, %s70
      %s73 = sphi 0, %s72
      %s87 = sphi 0, %s73
      %s91 = sphi 0, %s91
      %s93 = sphi 0, %s91
      %s94 = sphi 0, %s93
      %s108 = sphi 0, %s94
      %s112 = sphi 0, %s112
      %s114 = sphi 0, %s112
      %s115 = sphi 0, %s114
      %s129 = sphi 0, %s115
      %s133 = sphi 0, %s133
      %s135 = sphi 0, %s133
      %s136 = sphi 0, %s135
      %s150 = sphi 0, %s136
      %s156 = sphi 0, %s158
      %s159 = sphi 0, %s156
      %s160 = sphi 0, %s159
      %s176 = sphi 0, %s160
    $region4: #{tpu_custom_call.1} parent=1 // loop_header_branch
      %18 = sbr.rel (%p16) target = $region8
    $region5: #{tpu_custom_call.1} parent=1 // loop_body
      %s20 = ssub.s32 %s15, 1
      %s21 = ssub.s32 %s15, 2
      %s22 = sadd.s32 %s15, 1
      %s23 = ssub.s32 %s15, %s22
      %p24 = scmp.eq.s32.totalorder %s23, 0
      %s26 = sadd.s32 %s25, 1
      %s27 = scalar_select %p24, %s25, %s26
      %p30 = pneg %p24
      %p31 = scmp.eq.s32.totalorder %s15, 1
      %p32 = por %p30, %p31
      %p33 = scmp.ne.s32.totalorder %s25, %s28
      %p34 = scmp.eq.s32.totalorder %s15, 0
      %p35 = por %p33, %p34
      %p36 = scmp.ne.s32.totalorder %s25, %s28
      %p37 = scmp.eq.s32.totalorder %s20, 1
      %p38 = por %p36, %p37
      %p39 = scmp.ne.s32.totalorder %s28, %s29
      %p40 = scmp.eq.s32.totalorder %s20, 0
      %p41 = por %p39, %p40
      %p42 = scmp.ne.s32.totalorder %s28, %s29
      %p43 = scmp.eq.s32.totalorder %s21, 1
      %p44 = por %p42, %p43
      %p46 = scmp.ne.s32.totalorder %s29, %s45
      %p47 = scmp.eq.s32.totalorder %s21, 0
      %p48 = por %p46, %p47
      %s50 = sadd.s32 %s49, 1
      %p53 = scmp.eq.s32.totalorder %s15, 1
      %p54 = scmp.ne.s32.totalorder %s49, %s51
      %p55 = scmp.eq.s32.totalorder %s15, 0
      %p56 = por %p54, %p55
      %p57 = scmp.ne.s32.totalorder %s49, %s51
      %p58 = scmp.eq.s32.totalorder %s20, 1
      %p59 = por %p57, %p58
      %p60 = scmp.ne.s32.totalorder %s51, %s52
      %p61 = scmp.eq.s32.totalorder %s20, 0
      %p62 = por %p60, %p61
      %p63 = scmp.ne.s32.totalorder %s51, %s52
      %p64 = scmp.eq.s32.totalorder %s21, 1
      %p65 = por %p63, %p64
      %p67 = scmp.ne.s32.totalorder %s52, %s66
      %p68 = scmp.eq.s32.totalorder %s21, 0
      %p69 = por %p67, %p68
      %s71 = sadd.s32 %s70, 1
      %p74 = scmp.eq.s32.totalorder %s15, 1
      %p75 = scmp.ne.s32.totalorder %s70, %s72
      %p76 = scmp.eq.s32.totalorder %s15, 0
      %p77 = por %p75, %p76
      %p78 = scmp.ne.s32.totalorder %s70, %s72
      %p79 = scmp.eq.s32.totalorder %s20, 1
      %p80 = por %p78, %p79
      %p81 = scmp.ne.s32.totalorder %s72, %s73
      %p82 = scmp.eq.s32.totalorder %s20, 0
      %p83 = por %p81, %p82
      %p84 = scmp.ne.s32.totalorder %s72, %s73
      %p85 = scmp.eq.s32.totalorder %s21, 1
      %p86 = por %p84, %p85
      %p88 = scmp.ne.s32.totalorder %s73, %s87
      %p89 = scmp.eq.s32.totalorder %s21, 0
      %p90 = por %p88, %p89
      %s92 = sadd.s32 %s91, 1
      %p95 = scmp.eq.s32.totalorder %s15, 1
      %p96 = scmp.ne.s32.totalorder %s91, %s93
      %p97 = scmp.eq.s32.totalorder %s15, 0
      %p98 = por %p96, %p97
      %p99 = scmp.ne.s32.totalorder %s91, %s93
      %p100 = scmp.eq.s32.totalorder %s20, 1
      %p101 = por %p99, %p100
      %p102 = scmp.ne.s32.totalorder %s93, %s94
      %p103 = scmp.eq.s32.totalorder %s20, 0
      %p104 = por %p102, %p103
      %p105 = scmp.ne.s32.totalorder %s93, %s94
      %p106 = scmp.eq.s32.totalorder %s21, 1
      %p107 = por %p105, %p106
      %p109 = scmp.ne.s32.totalorder %s94, %s108
      %p110 = scmp.eq.s32.totalorder %s21, 0
      %p111 = por %p109, %p110
      %s113 = sadd.s32 %s112, 1
      %p116 = scmp.eq.s32.totalorder %s15, 1
      %p117 = scmp.ne.s32.totalorder %s112, %s114
      %p118 = scmp.eq.s32.totalorder %s15, 0
      %p119 = por %p117, %p118
      %p120 = scmp.ne.s32.totalorder %s112, %s114
      %p121 = scmp.eq.s32.totalorder %s20, 1
      %p122 = por %p120, %p121
      %p123 = scmp.ne.s32.totalorder %s114, %s115
      %p124 = scmp.eq.s32.totalorder %s20, 0
      %p125 = por %p123, %p124
      %p126 = scmp.ne.s32.totalorder %s114, %s115
      %p127 = scmp.eq.s32.totalorder %s21, 1
      %p128 = por %p126, %p127
      %p130 = scmp.ne.s32.totalorder %s115, %s129
      %p131 = scmp.eq.s32.totalorder %s21, 0
      %p132 = por %p130, %p131
      %s134 = sadd.s32 %s133, 1
      %p137 = scmp.eq.s32.totalorder %s15, 1
      %p138 = scmp.ne.s32.totalorder %s133, %s135
      %p139 = scmp.eq.s32.totalorder %s15, 0
      %p140 = por %p138, %p139
      %p141 = scmp.ne.s32.totalorder %s133, %s135
      %p142 = scmp.eq.s32.totalorder %s20, 1
      %p143 = por %p141, %p142
      %p144 = scmp.ne.s32.totalorder %s135, %s136
      %p145 = scmp.eq.s32.totalorder %s20, 0
      %p146 = por %p144, %p145
      %p147 = scmp.ne.s32.totalorder %s135, %s136
      %p148 = scmp.eq.s32.totalorder %s21, 1
      %p149 = por %p147, %p148
      %p151 = scmp.ne.s32.totalorder %s136, %s150
      %p152 = scmp.eq.s32.totalorder %s21, 0
      %p153 = por %p151, %p152
      %s154 = ssub.s32 %s15, %s22
      %p155 = scmp.eq.s32.totalorder %s154, 0
      %s157 = sadd.s32 %s156, 1
      %s158 = scalar_select %p155, %s156, %s157
      %p161 = pneg %p155
      %p162 = scmp.eq.s32.totalorder %s15, 1
      %p163 = por %p161, %p162
      %p164 = scmp.ne.s32.totalorder %s156, %s159
      %p165 = scmp.eq.s32.totalorder %s15, 0
      %p166 = por %p164, %p165
      %p167 = scmp.ne.s32.totalorder %s156, %s159
      %p168 = scmp.eq.s32.totalorder %s20, 1
      %p169 = por %p167, %p168
      %p170 = scmp.ne.s32.totalorder %s159, %s160
      %p171 = scmp.eq.s32.totalorder %s20, 0
      %p172 = por %p170, %p171
      %p173 = scmp.ne.s32.totalorder %s159, %s160
      %p174 = scmp.eq.s32.totalorder %s21, 1
      %p175 = por %p173, %p174
      %p177 = scmp.ne.s32.totalorder %s160, %s176
      %p178 = scmp.eq.s32.totalorder %s21, 0
      %p179 = por %p177, %p178
      %p180 = scmp.le.s32.totalorder 1, %s15
      %p181 = scmp.lt.s32.totalorder %s15, 3
      %p182 = pnand %p180, %p181
      %p183 = pneg %p182
      // Predicated region
      $region9: #{tpu_custom_call.1} parent=5 // pred_check
        _
      $region10: #{tpu_custom_call.1} parent=5 // pred_check_branch
        %185 = sbr.rel (%p182) target = $region12
      $region11: #{tpu_custom_call.1} parent=5 // pred_region
        %s186 = ssub.s32 %s15, 1
        // Predicated region
        $region13: #{tpu_custom_call.1} parent=11 // pred_check
          %p187 = pneg %p62
        $region14: #{tpu_custom_call.1} parent=11 // pred_check_branch
          %189 = sbr.rel (%p187) target = $region16
        $region15: #{tpu_custom_call.1} parent=11 // pred_region
          _
        $region16: #{tpu_custom_call.1} parent=11 // pred_fallthru
          _
        // Predicated region
        $region17: #{tpu_custom_call.1} parent=11 // pred_check
          %p190 = pneg %p83
        $region18: #{tpu_custom_call.1} parent=11 // pred_check_branch
          %192 = sbr.rel (%p190) target = $region20
        $region19: #{tpu_custom_call.1} parent=11 // pred_region
          _
        $region20: #{tpu_custom_call.1} parent=11 // pred_fallthru
          _
        // Predicated region
        $region21: #{tpu_custom_call.1} parent=11 // pred_check
          %p193 = pneg %p104
        $region22: #{tpu_custom_call.1} parent=11 // pred_check_branch
          %195 = sbr.rel (%p193) target = $region24
        $region23: #{tpu_custom_call.1} parent=11 // pred_region
          _
        $region24: #{tpu_custom_call.1} parent=11 // pred_fallthru
          _
        // Predicated region
        $region25: #{tpu_custom_call.1} parent=11 // pred_check
          %p196 = pneg %p125
        $region26: #{tpu_custom_call.1} parent=11 // pred_check_branch
          %198 = sbr.rel (%p196) target = $region28
        $region27: #{tpu_custom_call.1} parent=11 // pred_region
          _
        $region28: #{tpu_custom_call.1} parent=11 // pred_fallthru
          _
        // Predicated region
        $region29: #{tpu_custom_call.1} parent=11 // pred_check
          %p199 = pneg %p146
        $region30: #{tpu_custom_call.1} parent=11 // pred_check_branch
          %201 = sbr.rel (%p199) target = $region32
        $region31: #{tpu_custom_call.1} parent=11 // pred_region
          _
        $region32: #{tpu_custom_call.1} parent=11 // pred_fallthru
          _
      $region12: #{tpu_custom_call.1} parent=5 // pred_fallthru
        _
      %p202 = scmp.lt.s32.totalorder %s15, 2
      // Predicated region
      $region33: #{tpu_custom_call.1} parent=5 // pred_check
        %p203 = pneg %p202
      $region34: #{tpu_custom_call.1} parent=5 // pred_check_branch
        %205 = sbr.rel (%p203) target = $region36
      $region35: #{tpu_custom_call.1} parent=5 // pred_region
        // Predicated region
        $region37: #{tpu_custom_call.1} parent=35 // pred_check
          %p206 = pneg %p35
        $region38: #{tpu_custom_call.1} parent=35 // pred_check_branch
          %208 = sbr.rel (%p206) target = $region40
        $region39: #{tpu_custom_call.1} parent=35 // pred_region
          %p209 = scmp.lt.s32.totalorder %s15, 1
          %s210 = scalar_select %p209, %s15, 1
          %s211 = smul.addr %s210, 2
          %s212 = smul.addr %s211, 4
          %s213 = scalar_lea.vmem %s0, %s212
        $region40: #{tpu_custom_call.1} parent=35 // pred_fallthru
          _
      $region36: #{tpu_custom_call.1} parent=5 // pred_fallthru
        _
      %p214 = scmp.le.s32.totalorder 1, %s15
      %p215 = scmp.lt.s32.totalorder %s15, 3
      %p216 = pnand %p214, %p215
      %p217 = pneg %p216
      // Predicated region
      $region41: #{tpu_custom_call.1} parent=5 // pred_check
        _
      $region42: #{tpu_custom_call.1} parent=5 // pred_check_branch
        %219 = sbr.rel (%p216) target = $region44
      $region43: #{tpu_custom_call.1} parent=5 // pred_region
        %s220 = ssub.s32 %s15, 1
        %p221 = scmp.lt.s32.totalorder %s20, 1
        %s222 = scalar_select %p221, %s20, 1
        %s223 = smul.addr %s222, 2
        %s224 = smul.addr %s223, 4
        %s225 = scalar_lea.vmem %s0, %s224
        %p226 = pneg %p41
        %p227 = pneg %p38
        %p228 = pneg %p62
        %p229 = pneg %p59
        %p230 = pneg %p83
        %p231 = pneg %p80
        %p232 = pneg %p104
        %p233 = pneg %p101
        %p234 = pneg %p125
        %p235 = pneg %p122
        %p236 = pneg %p146
        %p237 = pneg %p143
        %p238 = pneg %p172
        %p239 = pneg %p169
        %s240 = sand.u32 %s159, 1
        %s241 = scalar_lea.sflag [#allocation3], %s240
        %s242 = sand.u32 %s159, 1
        %s243 = smul.addr %s242, 16
        %s244 = scalar_lea.vmem [#allocation2], %s243
        %p245 = scmp.lt.s32.totalorder %s20, 1
        %s246 = scalar_select %p245, %s20, 1
        %s247 = smul.addr %s246, 2
        %s248 = smul.addr %s247, 4
        %s249 = scalar_lea.vmem %s0, %s248
        %v251 = vld [vmem:[%s249] sm:$0xff]
        %v253 = vcombine.high %v251, %v251
        %vm255 = vcmask 1043456
        %v256 = vsel %vm255, %v251, 0.0
        %v257 = vsel %vm255, %v253, 0.0
        %v258 = vadd.f32 %v256, %v257
        %259 = vadd.xlane.f32.xlu0 %v258
        %v260 = vpop.xlane.xlu0 %259
        %v261 = vmul.f32 %v260, 0.00390625
        %v262 = vld [vmem:[%s3] sm:$0xff]
        %v263 = vld [vmem:[%s4] sm:$0xff]
        %vm264 = vcmask 31744
        %v266 = vsel %vm264, %v262, 0
        %v269 = vsel %vm255, %v261, 0
        %271 = vmatprep.subr.mxu0 0.0
        %272 = vmatpush1.msra.mxu0 0.0
        %273 = vmatprep.subr.mxu0 0.0
        %274 = vmatpush1.msra.mxu0 0.0
        %275 = vmatprep.subr.mxu0 0.0
        %276 = vmatpush1.msra.mxu0 0.0
        %277 = vmatprep.subr.mxu0 0.0
        %278 = vmatpush1.msra.mxu0 0.0
        %279 = vmatprep.subr.mxu0 0.0
        %280 = vmatpush1.msra.mxu0 0.0
        %281 = vmatprep.subr.mxu0 0.0
        %282 = vmatpush1.msra.mxu0 0.0
        %283 = vmatprep.subr.mxu0 0.0
        %284 = vmatpush1.msra.mxu0 0.0
        %285 = vmatprep.subr.mxu0 0.0
        %286 = vmatpush1.msra.mxu0 0.0
        %287 = vmatprep.subr.mxu0 0.0
        %288 = vmatpush1.msra.mxu0 0.0
        %289 = vmatprep.subr.mxu0 0.0
        %290 = vmatpush1.msra.mxu0 0.0
        %291 = vmatprep.subr.mxu0 0.0
        %292 = vmatpush1.msra.mxu0 0.0
        %293 = vmatprep.subr.mxu0 0.0
        %294 = vmatpush1.msra.mxu0 0.0
        %295 = vmatprep.subr.mxu0 0.0
        %296 = vmatpush1.msra.mxu0 0.0
        %297 = vmatprep.subr.mxu0 0.0
        %298 = vmatpush1.msra.mxu0 0.0
        %299 = vmatprep.subr.mxu0 0.0
        %300 = vmatpush1.msra.mxu0 0.0
        %301 = vmatprep.subr.mxu0 0.0
        %302 = vmatpush1.msra.mxu0 %v269
        %303 = vmatprep.subr.mxu0 0.0
        %304 = vmatpush2.msra.mxu0 0.0
        %305 = vmatprep.subr.mxu0 0.0
        %306 = vmatpush2.msra.mxu0 0.0
        %307 = vmatprep.subr.mxu0 0.0
        %308 = vmatpush2.msra.mxu0 0.0
        %309 = vmatprep.subr.mxu0 0.0
        %310 = vmatpush2.msra.mxu0 0.0
        %311 = vmatprep.subr.mxu0 0.0
        %312 = vmatpush2.msra.mxu0 0.0
        %313 = vmatprep.subr.mxu0 0.0
        %314 = vmatpush2.msra.mxu0 0.0
        %315 = vmatprep.subr.mxu0 0.0
        %316 = vmatpush2.msra.mxu0 0.0
        %317 = vmatprep.subr.mxu0 0.0
        %318 = vmatpush2.msra.mxu0 0.0
        %319 = vmatprep.subr.mxu0 0.0
        %320 = vmatpush2.msra.mxu0 0.0
        %321 = vmatprep.subr.mxu0 0.0
        %322 = vmatpush2.msra.mxu0 0.0
        %323 = vmatprep.subr.mxu0 0.0
        %324 = vmatpush2.msra.mxu0 0.0
        %325 = vmatprep.subr.mxu0 0.0
        %326 = vmatpush2.msra.mxu0 0.0
        %327 = vmatprep.subr.mxu0 0.0
        %328 = vmatpush2.msra.mxu0 0.0
        %329 = vmatprep.subr.mxu0 0.0
        %330 = vmatpush2.msra.mxu0 0.0
        %331 = vmatprep.subr.mxu0 0.0
        %332 = vmatpush2.msra.mxu0 0.0
        %333 = vmatprep.subr.mxu0 0.0
        %334 = vmatpush2.msra.mxu0 0.0
        %335 = vmatprep.mubr.f32.mxu0 0.0
        %336 = vmatmul.mubr.f32.gmra.mxu0 %v266
        %v337 = vpop.f32.mrf.mxu0
        %v338 = vadd.f32 %v263, %v337
        %v339 = vpop.f32.mrf.mxu0
        %340 = vdwg.mxu0
        %v341 = vxor.u32 %v338, 2147483648
        %v342 = vmul.f32 %v341, 1.442695
        %v343 = vpow.pop %v342
        %v344 = vadd.f32 %v343, 1.0
        %v345 = vrcp.pop %v344
        %v346 = vmul.f32 1.0, %v345
        %v347 = vpack.c.bf16 %v251, %v251
        %v348 = vpack.c.bf16 %v253, %v253
        %350 = vrot.lane.b32.xlu0 %v348, 17
        %v351 = vpop.permute.xlu0 %350
        %353 = vrot.lane.b32.xlu0 %v347, 17
        %v354 = vpop.permute.xlu0 %353
        %vm355 = vcmask 138240
        %v356 = vsel %vm355, %v354, %v351
        %vm357 = vcmask 138240
        %v360 = vsel %vm357, %v351, %v354
        %v361 = vld [vmem:[%s1] sm:$0xf]
        %v363 = vsel %vm264, %v361, 0
        %vm365 = vcmask 1041408
        %v366 = vsel %vm365, %v360, 0
        %v369 = vsel %vm365, %v356, 0
        %371 = vmatprep.subr.bf16.mxu0 0
        %372 = vmatpush1.bf16.msra.mxu0 0
        %373 = vmatprep.subr.bf16.mxu0 0
        %374 = vmatpush1.bf16.msra.mxu0 0
        %375 = vmatprep.subr.bf16.mxu0 0
        %376 = vmatpush1.bf16.msra.mxu0 0
        %377 = vmatprep.subr.bf16.mxu0 0
        %378 = vmatpush1.bf16.msra.mxu0 0
        %379 = vmatprep.subr.bf16.mxu0 0
        %380 = vmatpush1.bf16.msra.mxu0 0
        %381 = vmatprep.subr.bf16.mxu0 0
        %382 = vmatpush1.bf16.msra.mxu0 0
        %383 = vmatprep.subr.bf16.mxu0 0
        %384 = vmatpush1.bf16.msra.mxu0 0
        %385 = vmatprep.subr.bf16.mxu0 %v369
        %386 = vmatpush1.bf16.msra.mxu0 %v366
        %387 = vmatprep.subr.bf16.mxu0 0
        %388 = vmatpush2.bf16.msra.mxu0 0
        %389 = vmatprep.subr.bf16.mxu0 0
        %390 = vmatpush2.bf16.msra.mxu0 0
        %391 = vmatprep.subr.bf16.mxu0 0
        %392 = vmatpush2.bf16.msra.mxu0 0
        %393 = vmatprep.subr.bf16.mxu0 0
        %394 = vmatpush2.bf16.msra.mxu0 0
        %395 = vmatprep.subr.bf16.mxu0 0
        %396 = vmatpush2.bf16.msra.mxu0 0
        %397 = vmatprep.subr.bf16.mxu0 0
        %398 = vmatpush2.bf16.msra.mxu0 0
        %399 = vmatprep.subr.bf16.mxu0 0
        %400 = vmatpush2.bf16.msra.mxu0 0
        %401 = vmatprep.subr.bf16.mxu0 0
        %402 = vmatpush2.bf16.msra.mxu0 0
        %403 = vmatprep.mubr.bf16.mxu0 0
        %404 = vmatmul.mubr.bf16.gmra.mxu0 %v363
        %v405 = vpop.f32.mrf.mxu0
        %v406 = vadd.f32 0.0, %v405
        %v407 = vpop.f32.mrf.mxu0
        %v408 = vadd.f32 0.0, %v407
        %v409 = vpop.f32.mrf.mxu0
        %v410 = vpop.f32.mrf.mxu0
        %411 = vdwg.mxu0
        %v412 = vld [vmem:[%s5] sm:$0x3]
        %v414 = vlaneseq
        %v415 = vshrl.u32 %v414, 7
        %v416 = vsub.s32 0, %v415
        %v417 = vrot.slane %v412, %v416
        %v418 = vlaneseq
        %v419 = vshrl.u32 %v418, 7
        %v420 = vsub.s32 1, %v419
        %v421 = vrot.slane %v412, %v420
        %v424 = vmul.f32 %v406, %v417
        %v425 = vmul.f32 %v408, %v421
        %v426 = vadd.f32 %v424, 0.0
        %v427 = vadd.f32 %v425, 0.0
        %428 = vrot.lane.b32.xlu0 %v348, 16
        %v429 = vpop.permute.xlu0 %428
        %430 = vrot.lane.b32.xlu0 %v347, 16
        %v431 = vpop.permute.xlu0 %430
        %vm432 = vcmask 130048
        %v433 = vsel %vm432, %v431, %v429
        %vm434 = vcmask 130048
        %v437 = vsel %vm434, %v429, %v431
        %s438 = scalar_lea.vmem %s1, 4
        %v439 = vld [vmem:[%s438] sm:$0xf]
        %v441 = vsel %vm264, %v439, 0
        %v443 = vsel %vm365, %v437, 0
        %v446 = vsel %vm365, %v433, 0
        %448 = vmatprep.subr.bf16.mxu0 0
        %449 = vmatpush1.bf16.msra.mxu0 0
        %450 = vmatprep.subr.bf16.mxu0 0
        %451 = vmatpush1.bf16.msra.mxu0 0
        %452 = vmatprep.subr.bf16.mxu0 0
        %453 = vmatpush1.bf16.msra.mxu0 0
        %454 = vmatprep.subr.bf16.mxu0 0
        %455 = vmatpush1.bf16.msra.mxu0 0
        %456 = vmatprep.subr.bf16.mxu0 0
        %457 = vmatpush1.bf16.msra.mxu0 0
        %458 = vmatprep.subr.bf16.mxu0 0
        %459 = vmatpush1.bf16.msra.mxu0 0
        %460 = vmatprep.subr.bf16.mxu0 0
        %461 = vmatpush1.bf16.msra.mxu0 0
        %462 = vmatprep.subr.bf16.mxu0 %v446
        %463 = vmatpush1.bf16.msra.mxu0 %v443
        %464 = vmatprep.subr.bf16.mxu0 0
        %465 = vmatpush2.bf16.msra.mxu0 0
        %466 = vmatprep.subr.bf16.mxu0 0
        %467 = vmatpush2.bf16.msra.mxu0 0
        %468 = vmatprep.subr.bf16.mxu0 0
        %469 = vmatpush2.bf16.msra.mxu0 0
        %470 = vmatprep.subr.bf16.mxu0 0
        %471 = vmatpush2.bf16.msra.mxu0 0
        %472 = vmatprep.subr.bf16.mxu0 0
        %473 = vmatpush2.bf16.msra.mxu0 0
        %474 = vmatprep.subr.bf16.mxu0 0
        %475 = vmatpush2.bf16.msra.mxu0 0
        %476 = vmatprep.subr.bf16.mxu0 0
        %477 = vmatpush2.bf16.msra.mxu0 0
        %478 = vmatprep.subr.bf16.mxu0 0
        %479 = vmatpush2.bf16.msra.mxu0 0
        %480 = vmatprep.mubr.bf16.mxu0 0
        %481 = vmatmul.mubr.bf16.gmra.mxu0 %v441
        %v482 = vpop.f32.mrf.mxu0
        %v483 = vadd.f32 0.0, %v482
        %v484 = vpop.f32.mrf.mxu0
        %v485 = vadd.f32 0.0, %v484
        %v486 = vpop.f32.mrf.mxu0
        %v487 = vpop.f32.mrf.mxu0
        %488 = vdwg.mxu0
        %s489 = scalar_lea.vmem %s5, 2
        %v490 = vld [vmem:[%s489] sm:$0x3]
        %v492 = vlaneseq
        %v493 = vshrl.u32 %v492, 7
        %v494 = vsub.s32 0, %v493
        %v495 = vrot.slane %v490, %v494
        %v496 = vlaneseq
        %v497 = vshrl.u32 %v496, 7
        %v498 = vsub.s32 1, %v497
        %v499 = vrot.slane %v490, %v498
        %v502 = vmul.f32 %v483, %v495
        %v503 = vmul.f32 %v485, %v499
        %v504 = vadd.f32 %v426, %v502
        %v505 = vadd.f32 %v427, %v503
        %506 = vrot.lane.b32.xlu0 %v348, 15
        %v507 = vpop.permute.xlu0 %506
        %508 = vrot.lane.b32.xlu0 %v347, 15
        %v509 = vpop.permute.xlu0 %508
        %vm510 = vcmask 121856
        %v511 = vsel %vm510, %v509, %v507
        %vm512 = vcmask 121856
        %v515 = vsel %vm512, %v507, %v509
        %s516 = scalar_lea.vmem %s1, 8
        %v517 = vld [vmem:[%s516] sm:$0xf]
        %v519 = vsel %vm264, %v517, 0
        %v521 = vsel %vm365, %v515, 0
        %v524 = vsel %vm365, %v511, 0
        %526 = vmatprep.subr.bf16.mxu0 0
        %527 = vmatpush1.bf16.msra.mxu0 0
        %528 = vmatprep.subr.bf16.mxu0 0
        %529 = vmatpush1.bf16.msra.mxu0 0
        %530 = vmatprep.subr.bf16.mxu0 0
        %531 = vmatpush1.bf16.msra.mxu0 0
        %532 = vmatprep.subr.bf16.mxu0 0
        %533 = vmatpush1.bf16.msra.mxu0 0
        %534 = vmatprep.subr.bf16.mxu0 0
        %535 = vmatpush1.bf16.msra.mxu0 0
        %536 = vmatprep.subr.bf16.mxu0 0
        %537 = vmatpush1.bf16.msra.mxu0 0
        %538 = vmatprep.subr.bf16.mxu0 0
        %539 = vmatpush1.bf16.msra.mxu0 0
        %540 = vmatprep.subr.bf16.mxu0 %v524
        %541 = vmatpush1.bf16.msra.mxu0 %v521
        %542 = vmatprep.subr.bf16.mxu0 0
        %543 = vmatpush2.bf16.msra.mxu0 0
        %544 = vmatprep.subr.bf16.mxu0 0
        %545 = vmatpush2.bf16.msra.mxu0 0
        %546 = vmatprep.subr.bf16.mxu0 0
        %547 = vmatpush2.bf16.msra.mxu0 0
        %548 = vmatprep.subr.bf16.mxu0 0
        %549 = vmatpush2.bf16.msra.mxu0 0
        %550 = vmatprep.subr.bf16.mxu0 0
        %551 = vmatpush2.bf16.msra.mxu0 0
        %552 = vmatprep.subr.bf16.mxu0 0
        %553 = vmatpush2.bf16.msra.mxu0 0
        %554 = vmatprep.subr.bf16.mxu0 0
        %555 = vmatpush2.bf16.msra.mxu0 0
        %556 = vmatprep.subr.bf16.mxu0 0
        %557 = vmatpush2.bf16.msra.mxu0 0
        %558 = vmatprep.mubr.bf16.mxu0 0
        %559 = vmatmul.mubr.bf16.gmra.mxu0 %v519
        %v560 = vpop.f32.mrf.mxu0
        %v561 = vadd.f32 0.0, %v560
        %v562 = vpop.f32.mrf.mxu0
        %v563 = vadd.f32 0.0, %v562
        %v564 = vpop.f32.mrf.mxu0
        %v565 = vpop.f32.mrf.mxu0
        %566 = vdwg.mxu0
        %s567 = scalar_lea.vmem %s5, 4
        %v568 = vld [vmem:[%s567] sm:$0x3]
        %v570 = vlaneseq
        %v571 = vshrl.u32 %v570, 7
        %v572 = vsub.s32 0, %v571
        %v573 = vrot.slane %v568, %v572
        %v574 = vlaneseq
        %v575 = vshrl.u32 %v574, 7
        %v576 = vsub.s32 1, %v575
        %v577 = vrot.slane %v568, %v576
        %v580 = vmul.f32 %v561, %v573
        %v581 = vmul.f32 %v563, %v577
        %v582 = vadd.f32 %v504, %v580
        %v583 = vadd.f32 %v505, %v581
        %584 = vrot.lane.b32.xlu0 %v348, 1
        %v585 = vpop.permute.xlu0 %584
        %586 = vrot.lane.b32.xlu0 %v347, 1
        %v587 = vpop.permute.xlu0 %586
        %vm588 = vcmask 7168
        %v589 = vsel %vm588, %v587, %v585
        %vm590 = vcmask 7168
        %v593 = vsel %vm590, %v585, %v587
        %s594 = scalar_lea.vmem %s1, 12
        %v595 = vld [vmem:[%s594] sm:$0xf]
        %v597 = vsel %vm264, %v595, 0
        %v599 = vsel %vm365, %v593, 0
        %v602 = vsel %vm365, %v589, 0
        %604 = vmatprep.subr.bf16.mxu0 0
        %605 = vmatpush1.bf16.msra.mxu0 0
        %606 = vmatprep.subr.bf16.mxu0 0
        %607 = vmatpush1.bf16.msra.mxu0 0
        %608 = vmatprep.subr.bf16.mxu0 0
        %609 = vmatpush1.bf16.msra.mxu0 0
        %610 = vmatprep.subr.bf16.mxu0 0
        %611 = vmatpush1.bf16.msra.mxu0 0
        %612 = vmatprep.subr.bf16.mxu0 0
        %613 = vmatpush1.bf16.msra.mxu0 0
        %614 = vmatprep.subr.bf16.mxu0 0
        %615 = vmatpush1.bf16.msra.mxu0 0
        %616 = vmatprep.subr.bf16.mxu0 0
        %617 = vmatpush1.bf16.msra.mxu0 0
        %618 = vmatprep.subr.bf16.mxu0 %v602
        %619 = vmatpush1.bf16.msra.mxu0 %v599
        %620 = vmatprep.subr.bf16.mxu0 0
        %621 = vmatpush2.bf16.msra.mxu0 0
        %622 = vmatprep.subr.bf16.mxu0 0
        %623 = vmatpush2.bf16.msra.mxu0 0
        %624 = vmatprep.subr.bf16.mxu0 0
        %625 = vmatpush2.bf16.msra.mxu0 0
        %626 = vmatprep.subr.bf16.mxu0 0
        %627 = vmatpush2.bf16.msra.mxu0 0
        %628 = vmatprep.subr.bf16.mxu0 0
        %629 = vmatpush2.bf16.msra.mxu0 0
        %630 = vmatprep.subr.bf16.mxu0 0
        %631 = vmatpush2.bf16.msra.mxu0 0
        %632 = vmatprep.subr.bf16.mxu0 0
        %633 = vmatpush2.bf16.msra.mxu0 0
        %634 = vmatprep.subr.bf16.mxu0 0
        %635 = vmatpush2.bf16.msra.mxu0 0
        %636 = vmatprep.mubr.bf16.mxu0 0
        %637 = vmatmul.mubr.bf16.gmra.mxu0 %v597
        %v638 = vpop.f32.mrf.mxu0
        %v639 = vadd.f32 0.0, %v638
        %v640 = vpop.f32.mrf.mxu0
        %v641 = vadd.f32 0.0, %v640
        %v642 = vpop.f32.mrf.mxu0
        %v643 = vpop.f32.mrf.mxu0
        %644 = vdwg.mxu0
        %s645 = scalar_lea.vmem %s5, 6
        %v646 = vld [vmem:[%s645] sm:$0x3]
        %v648 = vlaneseq
        %v649 = vshrl.u32 %v648, 7
        %v650 = vsub.s32 0, %v649
        %v651 = vrot.slane %v646, %v650
        %v652 = vlaneseq
        %v653 = vshrl.u32 %v652, 7
        %v654 = vsub.s32 1, %v653
        %v655 = vrot.slane %v646, %v654
        %v658 = vmul.f32 %v639, %v651
        %v659 = vmul.f32 %v641, %v655
        %v660 = vadd.f32 %v582, %v658
        %v661 = vadd.f32 %v583, %v659
        %s662 = scalar_lea.vmem %s1, 16
        %v663 = vld [vmem:[%s662] sm:$0xf]
        %v665 = vsel %vm264, %v663, 0
        %v668 = vsel %vm365, %v347, 0
        %v671 = vsel %vm365, %v348, 0
        %673 = vmatprep.subr.bf16.mxu0 0
        %674 = vmatpush1.bf16.msra.mxu0 0
        %675 = vmatprep.subr.bf16.mxu0 0
        %676 = vmatpush1.bf16.msra.mxu0 0
        %677 = vmatprep.subr.bf16.mxu0 0
        %678 = vmatpush1.bf16.msra.mxu0 0
        %679 = vmatprep.subr.bf16.mxu0 0
        %680 = vmatpush1.bf16.msra.mxu0 0
        %681 = vmatprep.subr.bf16.mxu0 0
        %682 = vmatpush1.bf16.msra.mxu0 0
        %683 = vmatprep.subr.bf16.mxu0 0
        %684 = vmatpush1.bf16.msra.mxu0 0
        %685 = vmatprep.subr.bf16.mxu0 0
        %686 = vmatpush1.bf16.msra.mxu0 0
        %687 = vmatprep.subr.bf16.mxu0 %v671
        %688 = vmatpush1.bf16.msra.mxu0 %v668
        %689 = vmatprep.subr.bf16.mxu0 0
        %690 = vmatpush2.bf16.msra.mxu0 0
        %691 = vmatprep.subr.bf16.mxu0 0
        %692 = vmatpush2.bf16.msra.mxu0 0
        %693 = vmatprep.subr.bf16.mxu0 0
        %694 = vmatpush2.bf16.msra.mxu0 0
        %695 = vmatprep.subr.bf16.mxu0 0
        %696 = vmatpush2.bf16.msra.mxu0 0
        %697 = vmatprep.subr.bf16.mxu0 0
        %698 = vmatpush2.bf16.msra.mxu0 0
        %699 = vmatprep.subr.bf16.mxu0 0
        %700 = vmatpush2.bf16.msra.mxu0 0
        %701 = vmatprep.subr.bf16.mxu0 0
        %702 = vmatpush2.bf16.msra.mxu0 0
        %703 = vmatprep.subr.bf16.mxu0 0
        %704 = vmatpush2.bf16.msra.mxu0 0
        %705 = vmatprep.mubr.bf16.mxu0 0
        %706 = vmatmul.mubr.bf16.gmra.mxu0 %v665
        %v707 = vpop.f32.mrf.mxu0
        %v708 = vadd.f32 0.0, %v707
        %v709 = vpop.f32.mrf.mxu0
        %v710 = vadd.f32 0.0, %v709
        %v711 = vpop.f32.mrf.mxu0
        %v712 = vpop.f32.mrf.mxu0
        %713 = vdwg.mxu0
        %v714 = vadd.f32 %v660, %v708
        %v715 = vadd.f32 %v661, %v710
        %716 = vrot.lane.b32.xlu0 %v347, 127
        %v717 = vpop.permute.xlu0 %716
        %718 = vrot.lane.b32.xlu0 %v348, 127
        %v719 = vpop.permute.xlu0 %718
        %vm720 = vcmask 1039360
        %v721 = vsel %vm720, %v717, %v719
        %vm722 = vcmask 1039360
        %v725 = vsel %vm722, %v719, %v717
        %s726 = scalar_lea.vmem %s1, 20
        %v727 = vld [vmem:[%s726] sm:$0xf]
        %v729 = vsel %vm264, %v727, 0
        %v732 = vsel %vm365, %v721, 0
        %v734 = vsel %vm365, %v725, 0
        %736 = vmatprep.subr.bf16.mxu0 0
        %737 = vmatpush1.bf16.msra.mxu0 0
        %738 = vmatprep.subr.bf16.mxu0 0
        %739 = vmatpush1.bf16.msra.mxu0 0
        %740 = vmatprep.subr.bf16.mxu0 0
        %741 = vmatpush1.bf16.msra.mxu0 0
        %742 = vmatprep.subr.bf16.mxu0 0
        %743 = vmatpush1.bf16.msra.mxu0 0
        %744 = vmatprep.subr.bf16.mxu0 0
        %745 = vmatpush1.bf16.msra.mxu0 0
        %746 = vmatprep.subr.bf16.mxu0 0
        %747 = vmatpush1.bf16.msra.mxu0 0
        %748 = vmatprep.subr.bf16.mxu0 0
        %749 = vmatpush1.bf16.msra.mxu0 0
        %750 = vmatprep.subr.bf16.mxu0 %v734
        %751 = vmatpush1.bf16.msra.mxu0 %v732
        %752 = vmatprep.subr.bf16.mxu0 0
        %753 = vmatpush2.bf16.msra.mxu0 0
        %754 = vmatprep.subr.bf16.mxu0 0
        %755 = vmatpush2.bf16.msra.mxu0 0
        %756 = vmatprep.subr.bf16.mxu0 0
        %757 = vmatpush2.bf16.msra.mxu0 0
        %758 = vmatprep.subr.bf16.mxu0 0
        %759 = vmatpush2.bf16.msra.mxu0 0
        %760 = vmatprep.subr.bf16.mxu0 0
        %761 = vmatpush2.bf16.msra.mxu0 0
        %762 = vmatprep.subr.bf16.mxu0 0
        %763 = vmatpush2.bf16.msra.mxu0 0
        %764 = vmatprep.subr.bf16.mxu0 0
        %765 = vmatpush2.bf16.msra.mxu0 0
        %766 = vmatprep.subr.bf16.mxu0 0
        %767 = vmatpush2.bf16.msra.mxu0 0
        %768 = vmatprep.mubr.bf16.mxu0 0
        %769 = vmatmul.mubr.bf16.gmra.mxu0 %v729
        %v770 = vpop.f32.mrf.mxu0
        %v771 = vadd.f32 0.0, %v770
        %v772 = vpop.f32.mrf.mxu0
        %v773 = vadd.f32 0.0, %v772
        %v774 = vpop.f32.mrf.mxu0
        %v775 = vpop.f32.mrf.mxu0
        %776 = vdwg.mxu0
        %s777 = scalar_lea.vmem %s5, 10
        %v778 = vld [vmem:[%s777] sm:$0x3]
        %v780 = vlaneseq
        %v781 = vshrl.u32 %v780, 7
        %v782 = vsub.s32 0, %v781
        %v783 = vrot.slane %v778, %v782
        %v784 = vlaneseq
        %v785 = vshrl.u32 %v784, 7
        %v786 = vsub.s32 1, %v785
        %v787 = vrot.slane %v778, %v786
        %v790 = vmul.f32 %v771, %v783
        %v791 = vmul.f32 %v773, %v787
        %v792 = vadd.f32 %v714, %v790
        %v793 = vadd.f32 %v715, %v791
        %794 = vrot.lane.b32.xlu0 %v347, 113
        %v795 = vpop.permute.xlu0 %794
        %796 = vrot.lane.b32.xlu0 %v348, 113
        %v797 = vpop.permute.xlu0 %796
        %vm798 = vcmask 924672
        %v799 = vsel %vm798, %v795, %v797
        %vm800 = vcmask 924672
        %v803 = vsel %vm800, %v797, %v795
        %s804 = scalar_lea.vmem %s1, 24
        %v805 = vld [vmem:[%s804] sm:$0xf]
        %v807 = vsel %vm264, %v805, 0
        %v810 = vsel %vm365, %v799, 0
        %v812 = vsel %vm365, %v803, 0
        %814 = vmatprep.subr.bf16.mxu0 0
        %815 = vmatpush1.bf16.msra.mxu0 0
        %816 = vmatprep.subr.bf16.mxu0 0
        %817 = vmatpush1.bf16.msra.mxu0 0
        %818 = vmatprep.subr.bf16.mxu0 0
        %819 = vmatpush1.bf16.msra.mxu0 0
        %820 = vmatprep.subr.bf16.mxu0 0
        %821 = vmatpush1.bf16.msra.mxu0 0
        %822 = vmatprep.subr.bf16.mxu0 0
        %823 = vmatpush1.bf16.msra.mxu0 0
        %824 = vmatprep.subr.bf16.mxu0 0
        %825 = vmatpush1.bf16.msra.mxu0 0
        %826 = vmatprep.subr.bf16.mxu0 0
        %827 = vmatpush1.bf16.msra.mxu0 0
        %828 = vmatprep.subr.bf16.mxu0 %v812
        %829 = vmatpush1.bf16.msra.mxu0 %v810
        %830 = vmatprep.subr.bf16.mxu0 0
        %831 = vmatpush2.bf16.msra.mxu0 0
        %832 = vmatprep.subr.bf16.mxu0 0
        %833 = vmatpush2.bf16.msra.mxu0 0
        %834 = vmatprep.subr.bf16.mxu0 0
        %835 = vmatpush2.bf16.msra.mxu0 0
        %836 = vmatprep.subr.bf16.mxu0 0
        %837 = vmatpush2.bf16.msra.mxu0 0
        %838 = vmatprep.subr.bf16.mxu0 0
        %839 = vmatpush2.bf16.msra.mxu0 0
        %840 = vmatprep.subr.bf16.mxu0 0
        %841 = vmatpush2.bf16.msra.mxu0 0
        %842 = vmatprep.subr.bf16.mxu0 0
        %843 = vmatpush2.bf16.msra.mxu0 0
        %844 = vmatprep.subr.bf16.mxu0 0
        %845 = vmatpush2.bf16.msra.mxu0 0
        %846 = vmatprep.mubr.bf16.mxu0 0
        %847 = vmatmul.mubr.bf16.gmra.mxu0 %v807
        %v848 = vpop.f32.mrf.mxu0
        %v849 = vadd.f32 0.0, %v848
        %v850 = vpop.f32.mrf.mxu0
        %v851 = vadd.f32 0.0, %v850
        %v852 = vpop.f32.mrf.mxu0
        %v853 = vpop.f32.mrf.mxu0
        %854 = vdwg.mxu0
        %s855 = scalar_lea.vmem %s5, 12
        %v856 = vld [vmem:[%s855] sm:$0x3]
        %v858 = vlaneseq
        %v859 = vshrl.u32 %v858, 7
        %v860 = vsub.s32 0, %v859
        %v861 = vrot.slane %v856, %v860
        %v862 = vlaneseq
        %v863 = vshrl.u32 %v862, 7
        %v864 = vsub.s32 1, %v863
        %v865 = vrot.slane %v856, %v864
        %v868 = vmul.f32 %v849, %v861
        %v869 = vmul.f32 %v851, %v865
        %v870 = vadd.f32 %v792, %v868
        %v871 = vadd.f32 %v793, %v869
        %872 = vrot.lane.b32.xlu0 %v347, 112
        %v873 = vpop.permute.xlu0 %872
        %874 = vrot.lane.b32.xlu0 %v348, 112
        %v875 = vpop.permute.xlu0 %874
        %vm876 = vcmask 916480
        %v877 = vsel %vm876, %v873, %v875
        %vm878 = vcmask 916480
        %v881 = vsel %vm878, %v875, %v873
        %s882 = scalar_lea.vmem %s1, 28
        %v883 = vld [vmem:[%s882] sm:$0xf]
        %v885 = vsel %vm264, %v883, 0
        %v888 = vsel %vm365, %v877, 0
        %v890 = vsel %vm365, %v881, 0
        %892 = vmatprep.subr.bf16.mxu0 0
        %893 = vmatpush1.bf16.msra.mxu0 0
        %894 = vmatprep.subr.bf16.mxu0 0
        %895 = vmatpush1.bf16.msra.mxu0 0
        %896 = vmatprep.subr.bf16.mxu0 0
        %897 = vmatpush1.bf16.msra.mxu0 0
        %898 = vmatprep.subr.bf16.mxu0 0
        %899 = vmatpush1.bf16.msra.mxu0 0
        %900 = vmatprep.subr.bf16.mxu0 0
        %901 = vmatpush1.bf16.msra.mxu0 0
        %902 = vmatprep.subr.bf16.mxu0 0
        %903 = vmatpush1.bf16.msra.mxu0 0
        %904 = vmatprep.subr.bf16.mxu0 0
        %905 = vmatpush1.bf16.msra.mxu0 0
        %906 = vmatprep.subr.bf16.mxu0 %v890
        %907 = vmatpush1.bf16.msra.mxu0 %v888
        %908 = vmatprep.subr.bf16.mxu0 0
        %909 = vmatpush2.bf16.msra.mxu0 0
        %910 = vmatprep.subr.bf16.mxu0 0
        %911 = vmatpush2.bf16.msra.mxu0 0
        %912 = vmatprep.subr.bf16.mxu0 0
        %913 = vmatpush2.bf16.msra.mxu0 0
        %914 = vmatprep.subr.bf16.mxu0 0
        %915 = vmatpush2.bf16.msra.mxu0 0
        %916 = vmatprep.subr.bf16.mxu0 0
        %917 = vmatpush2.bf16.msra.mxu0 0
        %918 = vmatprep.subr.bf16.mxu0 0
        %919 = vmatpush2.bf16.msra.mxu0 0
        %920 = vmatprep.subr.bf16.mxu0 0
        %921 = vmatpush2.bf16.msra.mxu0 0
        %922 = vmatprep.subr.bf16.mxu0 0
        %923 = vmatpush2.bf16.msra.mxu0 0
        %924 = vmatprep.mubr.bf16.mxu0 0
        %925 = vmatmul.mubr.bf16.gmra.mxu0 %v885
        %v926 = vpop.f32.mrf.mxu0
        %v927 = vadd.f32 0.0, %v926
        %v928 = vpop.f32.mrf.mxu0
        %v929 = vadd.f32 0.0, %v928
        %v930 = vpop.f32.mrf.mxu0
        %v931 = vpop.f32.mrf.mxu0
        %932 = vdwg.mxu0
        %s933 = scalar_lea.vmem %s5, 14
        %v934 = vld [vmem:[%s933] sm:$0x3]
        %v936 = vlaneseq
        %v937 = vshrl.u32 %v936, 7
        %v938 = vsub.s32 0, %v937
        %v939 = vrot.slane %v934, %v938
        %v940 = vlaneseq
        %v941 = vshrl.u32 %v940, 7
        %v942 = vsub.s32 1, %v941
        %v943 = vrot.slane %v934, %v942
        %v946 = vmul.f32 %v927, %v939
        %v947 = vmul.f32 %v929, %v943
        %v948 = vadd.f32 %v870, %v946
        %v949 = vadd.f32 %v871, %v947
        %950 = vrot.lane.b32.xlu0 %v347, 111
        %v951 = vpop.permute.xlu0 %950
        %952 = vrot.lane.b32.xlu0 %v348, 111
        %v953 = vpop.permute.xlu0 %952
        %vm954 = vcmask 908288
        %v955 = vsel %vm954, %v951, %v953
        %vm956 = vcmask 908288
        %v959 = vsel %vm956, %v953, %v951
        %s960 = scalar_lea.vmem %s1, 32
        %v961 = vld [vmem:[%s960] sm:$0xf]
        %v963 = vsel %vm264, %v961, 0
        %v966 = vsel %vm365, %v955, 0
        %v968 = vsel %vm365, %v959, 0
        %970 = vmatprep.subr.bf16.mxu0 0
        %971 = vmatpush1.bf16.msra.mxu0 0
        %972 = vmatprep.subr.bf16.mxu0 0
        %973 = vmatpush1.bf16.msra.mxu0 0
        %974 = vmatprep.subr.bf16.mxu0 0
        %975 = vmatpush1.bf16.msra.mxu0 0
        %976 = vmatprep.subr.bf16.mxu0 0
        %977 = vmatpush1.bf16.msra.mxu0 0
        %978 = vmatprep.subr.bf16.mxu0 0
        %979 = vmatpush1.bf16.msra.mxu0 0
        %980 = vmatprep.subr.bf16.mxu0 0
        %981 = vmatpush1.bf16.msra.mxu0 0
        %982 = vmatprep.subr.bf16.mxu0 0
        %983 = vmatpush1.bf16.msra.mxu0 0
        %984 = vmatprep.subr.bf16.mxu0 %v968
        %985 = vmatpush1.bf16.msra.mxu0 %v966
        %986 = vmatprep.subr.bf16.mxu0 0
        %987 = vmatpush2.bf16.msra.mxu0 0
        %988 = vmatprep.subr.bf16.mxu0 0
        %989 = vmatpush2.bf16.msra.mxu0 0
        %990 = vmatprep.subr.bf16.mxu0 0
        %991 = vmatpush2.bf16.msra.mxu0 0
        %992 = vmatprep.subr.bf16.mxu0 0
        %993 = vmatpush2.bf16.msra.mxu0 0
        %994 = vmatprep.subr.bf16.mxu0 0
        %995 = vmatpush2.bf16.msra.mxu0 0
        %996 = vmatprep.subr.bf16.mxu0 0
        %997 = vmatpush2.bf16.msra.mxu0 0
        %998 = vmatprep.subr.bf16.mxu0 0
        %999 = vmatpush2.bf16.msra.mxu0 0
        %1000 = vmatprep.subr.bf16.mxu0 0
        %1001 = vmatpush2.bf16.msra.mxu0 0
        %1002 = vmatprep.mubr.bf16.mxu0 0
        %1003 = vmatmul.mubr.bf16.gmra.mxu0 %v963
        %v1004 = vpop.f32.mrf.mxu0
        %v1005 = vadd.f32 0.0, %v1004
        %v1006 = vpop.f32.mrf.mxu0
        %v1007 = vadd.f32 0.0, %v1006
        %v1008 = vpop.f32.mrf.mxu0
        %v1009 = vpop.f32.mrf.mxu0
        %1010 = vdwg.mxu0
        %s1011 = scalar_lea.vmem %s5, 16
        %v1012 = vld [vmem:[%s1011] sm:$0x3]
        %v1014 = vlaneseq
        %v1015 = vshrl.u32 %v1014, 7
        %v1016 = vsub.s32 0, %v1015
        %v1017 = vrot.slane %v1012, %v1016
        %v1018 = vlaneseq
        %v1019 = vshrl.u32 %v1018, 7
        %v1020 = vsub.s32 1, %v1019
        %v1021 = vrot.slane %v1012, %v1020
        %v1024 = vmul.f32 %v1005, %v1017
        %v1025 = vmul.f32 %v1007, %v1021
        %v1026 = vadd.f32 %v948, %v1024
        %v1027 = vadd.f32 %v949, %v1025
        %v1028 = vld [vmem:[%s2] sm:$0xff]
        %1030 = vset.pattern.permute.xlu0 0
        %1031 = vperm.xlu0 %1030, %v1028
        %v1032 = vpop.permute.xlu0 %1031
        %v1034 = vadd.f32 %v1026, %v1032
        %v1035 = vadd.f32 %v1027, %v1032
        %v1036 = vmax.f32 %v1034, 0.0
        %v1037 = vmax.f32 %v1035, 0.0
        %1039 = vset.pattern.permute.xlu0 0
        %1040 = vperm.xlu0 %1039, %v346
        %v1041 = vpop.permute.xlu0 %1040
        %v1043 = vmul.f32 %v1036, %v1041
        %v1044 = vmul.f32 %v1037, %v1041
        %1045 = vst [vmem:[%s244] sm:$0xff] %v1043
        %1046 = vst [vmem:[%s244 + $0x8] sm:$0xff] %v1044
        %s1047 = sand.u32 %s159, 1
        %s1048 = scalar_lea.sflag [#allocation3], %s1047
        %s1049 = sand.u32 %s159, 1
        %s1050 = smul.addr %s1049, 16
        %s1051 = scalar_lea.vmem [#allocation2], %s1050
        // Predicated region
        $region45: #{tpu_custom_call.1} parent=43 // pred_check
          %p1052 = pneg %p169
        $region46: #{tpu_custom_call.1} parent=43 // pred_check_branch
          %1054 = sbr.rel (%p1052) target = $region48
        $region47: #{tpu_custom_call.1} parent=43 // pred_region
          %s1056 = ssub.s32 256, 256
          %1057 = vsyncadd %s1048, %s1056
          %s1058 = smul.addr %s20, 2
          %s1059 = smul.addr %s1058, 128
          %s1060 = scalar_lea.hbm %s6, %s1059
          %s1062 = sshll.u32 %s1051, 4
          %s1063 = int_to_ptr.vmem [resolvable:$true] %s1062
          %1065 = dma.vmem_to_hbm [thread:$0]  %s1063, 256, %s1060, %s1048
        $region48: #{tpu_custom_call.1} parent=43 // pred_fallthru
          _
      $region44: #{tpu_custom_call.1} parent=5 // pred_fallthru
        _
      %p1066 = scmp.le.s32.totalorder 2, %s15
      // Predicated region
      $region49: #{tpu_custom_call.1} parent=5 // pred_check
        %p1067 = pneg %p1066
      $region50: #{tpu_custom_call.1} parent=5 // pred_check_branch
        %1069 = sbr.rel (%p1067) target = $region52
      $region51: #{tpu_custom_call.1} parent=5 // pred_region
        %s1070 = ssub.s32 %s15, 2
        // Predicated region
        $region53: #{tpu_custom_call.1} parent=51 // pred_check
          %p1071 = pneg %p175
        $region54: #{tpu_custom_call.1} parent=51 // pred_check_branch
          %1073 = sbr.rel (%p1071) target = $region56
        $region55: #{tpu_custom_call.1} parent=51 // pred_region
          %s1074 = sand.u32 %s160, 1
          %s1075 = scalar_lea.sflag [#allocation3], %s1074
          %s1076 = sand.u32 %s160, 1
          %s1077 = smul.addr %s1076, 16
          %s1078 = scalar_lea.vmem [#allocation2], %s1077
          %1079 = dma.done %s1075, 256
        $region56: #{tpu_custom_call.1} parent=51 // pred_fallthru
          _
      $region52: #{tpu_custom_call.1} parent=5 // pred_fallthru
        _
    $region6: #{tpu_custom_call.1} parent=1 // loop_footer
      %s19 = sadd.s32 1, %s15
    $region7: #{tpu_custom_call.1} parent=1 // loop_footer_branch
      %14 = sbr.rel target = $region3
    $region8: #{tpu_custom_call.1} parent=1 // loop_exit
      _
    %1080 = vsyncpa [#allocation3], 1
    %s1081 = scalar_lea.sflag [#allocation3], 1
    %1082 = vsyncpa %s1081, 1

</llo_original>
